<compile_context>
chip_gen: v5e
topology: v5e:2x2
jax: 0.10.0
libtpu: 0.0.40
codegen_flags: <defaults>
</compile_context>

<pallas_src>
import math

import jax
import jax.numpy as jnp
from jax import lax
from jax.experimental import pallas as pl
from jax.experimental.pallas import tpu as pltpu

_MIB = 1024 * 1024


# --------------------------- kernel 1: scores ---------------------------

def _score_kernel(x_ref, w_ref, m_ref, out_ref):
    # x: (tn, F) node tile; w: (1, F) f32 scorer pre-scaled by 1/||scorer||;
    # m: (1, tn) mask tile; out: (1, tn) lane-dense scores.
    x = x_ref[...].astype(jnp.float32)
    s = lax.dot_general(
        w_ref[...], x,
        dimension_numbers=(((1,), (1,)), ((), ())),   # 'of,nf->on' -> (1, tn)
        preferred_element_type=jnp.float32)
    out_ref[...] = s + m_ref[...]


# --------------------------- kernel 2: gather ----------------------------

def _gather_scale_kernel(idx_ref, x_hbm, scale_ref, out_ref, buf, sem):
    # idx_ref: SMEM (k,) int32 row indices (scalar-prefetched)
    # x_hbm:   raw HBM ref (N, F)
    # scale_ref: VMEM (k, 1) f32 tanh(score), resident
    # out_ref: VMEM (k, F) whole output, written back once
    # buf:     VMEM (2, 1, F) row double-buffer; sem: DMA sems (2,)
    k_rows = out_ref.shape[0]

    def start_fetch(i, slot):
        pltpu.make_async_copy(
            x_hbm.at[pl.ds(idx_ref[i], 1), :], buf.at[slot], sem.at[slot]
        ).start()

    start_fetch(0, 0)

    def body(i, carry):
        slot = i % 2
        pltpu.make_async_copy(
            x_hbm.at[pl.ds(0, 1), :], buf.at[slot], sem.at[slot]
        ).wait()

        @pl.when(i + 1 < k_rows)
        def _():
            start_fetch(i + 1, 1 - slot)

        row = buf[slot].astype(jnp.float32)            # (1, F)
        scale = scale_ref[pl.ds(i, 1), :]              # (1, 1)
        out_ref[pl.ds(i, 1), :] = (row * scale).astype(out_ref.dtype)
        return carry

    lax.fori_loop(0, k_rows, body, 0,
                  unroll=True if k_rows <= 64 else 8)


# --------------------------- sizing helpers ------------------------------

def _vmem_budgets():
    """(per-input-buffer budget, vmem_limit_bytes), sized per chip generation."""
    try:
        cap = pltpu.get_tpu_info().vmem_capacity_bytes
    except Exception:                       # no TPU info -> conservative (v7x-sized)
        cap = 64 * _MIB
    if cap >= 128 * _MIB:                   # v5e / v6e: 128 MiB physical VMEM
        return 16 * _MIB, 48 * _MIB
    return 8 * _MIB, 28 * _MIB              # v7x: 64 MiB per TensorCore


def _choose_row_tile(n, f, itemsize, per_buf_bytes):
    # Budget with the lane-padded footprint: a (tn, F) VMEM block occupies
    # ceil(F/128)*128 lanes regardless of F.
    row_bytes = max(1, ((f + 127) // 128) * 128 * itemsize)
    tn = per_buf_bytes // row_bytes
    tn = max(128, (tn // 128) * 128)        # lane-dense (1, tn) output => tn % 128 == 0
    return n if tn >= n else tn


# --------------------------- glue (XLA) ----------------------------------

def _select_topk(flat_scores, k):
    # TODO(synk): only the k <= num_nodes branch of the torch module is
    # implemented; data-dependent top-k / -inf filtering / pad-with-last-valid
    # stays in XLA (k elements only). All-masked (n_valid == 0) is undefined in
    # the torch reference as well.
    vals, idx = lax.top_k(flat_scores, k)
    valid = vals > -jnp.inf
    n_valid = jnp.sum(valid.astype(jnp.int32))
    last_pos = jnp.maximum(n_valid - 1, 0)
    idx = jnp.where(valid, idx, idx[last_pos]).astype(jnp.int32)
    sel_vals = jnp.where(valid, vals, vals[last_pos])
    return idx, jnp.tanh(sel_vals).astype(jnp.float32)


# --------------------------- forward --------------------------------------

def topk_forward(node_embs, mask, scorer, k, *, row_tile=None,
                 small_problem_bytes=0):
    n, f = node_embs.shape
    in_dtype = node_embs.dtype

    # Fold 1/||scorer|| into the weight once; keep it in f32 (bf16-safe).
    scorer32 = scorer.astype(jnp.float32).reshape(1, f)
    w_scaled = scorer32 / jnp.linalg.norm(scorer32)

    if node_embs.size * node_embs.dtype.itemsize < small_problem_bytes:
        # Tiny problems: two pallas_call launches are pure fixed overhead;
        # let XLA fuse the whole thing.
        scores = (node_embs.astype(jnp.float32) @ w_scaled.reshape(f, 1)
                  + mask.reshape(-1, 1).astype(jnp.float32))
        idx, scales = _select_topk(scores.reshape(-1), k)
        out = (node_embs[idx].astype(jnp.float32) * scales[:, None]).astype(in_dtype)
        return out.T

    per_buf, vmem_limit = _vmem_budgets()
    tn = row_tile if row_tile is not None else _choose_row_tile(
        n, f, node_embs.dtype.itemsize, per_buf)
    mask_row = mask.reshape(1, n).astype(jnp.float32)

    # --- Kernel 1: scores = node_embs @ (scorer/||scorer||) + mask ---
    scores = pl.pallas_call(
        _score_kernel,
        out_shape=jax.ShapeDtypeStruct((1, n), jnp.float32),
        grid=(pl.cdiv(n, tn),),
        in_specs=[
            pl.BlockSpec((tn, f), lambda i: (i, 0)),    # streamed node tile
            pl.BlockSpec((1, f), lambda i: (0, 0)),     # resident f32 scaled scorer
            pl.BlockSpec((1, tn), lambda i: (0, i)),    # mask tile (lane-dense)
        ],
        out_specs=pl.BlockSpec((1, tn), lambda i: (0, i)),
        compiler_params=pltpu.CompilerParams(
            dimension_semantics=("parallel",),           # megacore shard on v7x
            vmem_limit_bytes=vmem_limit,
        ),
    )(node_embs, w_scaled, mask_row)

    idx, scales = _select_topk(scores.reshape(-1), k)
    scales2d = scales.reshape(k, 1)

    # --- Kernel 2: single-invocation manual gather + scale ---
    out_kf = pl.pallas_call(
        _gather_scale_kernel,
        out_shape=jax.ShapeDtypeStruct((k, f), in_dtype),
        grid_spec=pltpu.PrefetchScalarGridSpec(
            num_scalar_prefetch=1,
            grid=(1,),
            in_specs=[
                pl.BlockSpec(memory_space=pl.ANY),                 # node_embs in HBM
                pl.BlockSpec((k, 1), lambda i, idx_ref: (0, 0)),   # tanh(scores)
            ],
            out_specs=pl.BlockSpec((k, f), lambda i, idx_ref: (0, 0)),
            scratch_shapes=[
                pltpu.VMEM((2, 1, f), in_dtype),                   # row double-buffer
                pltpu.SemaphoreType.DMA((2,)),
            ],
        ),
        compiler_params=pltpu.CompilerParams(
            dimension_semantics=("arbitrary",),
        ),
    )(idx, node_embs, scales2d)

    # Kernel output stays lane-dense [k, F]; the tiny [F, k] transpose is XLA.
    return out_kf.T


# --------------------------- reference ------------------------------------

def _reference(node_embs, mask, scorer, k):
    scorer32 = scorer.astype(jnp.float32)
    w = scorer32 / jnp.linalg.norm(scorer32)
    scores = lax.dot_general(
        node_embs.astype(jnp.float32), w,
        dimension_numbers=(((1,), (0,)), ((), ())),
        precision=lax.Precision.HIGHEST) + mask.reshape(-1, 1).astype(jnp.float32)
    vals, idx = lax.top_k(scores.reshape(-1), k)
    valid = vals > -jnp.inf
    n_valid = jnp.sum(valid.astype(jnp.int32))
    last_pos = jnp.maximum(n_valid - 1, 0)
    idx = jnp.where(valid, idx, idx[last_pos])
    sel_vals = jnp.where(valid, vals, vals[last_pos])
    sel_nodes = node_embs[idx].astype(jnp.float32)
    return (sel_nodes * jnp.tanh(sel_vals)[:, None]).T


if __name__ == "__main__":
    key = jax.random.PRNGKey(0)

    # --- test 1: small shape consistent with the module spec ---
    N, FEATS, K = 8, 32, 4
    k_emb, k_scorer = jax.random.split(key)
    node_embs = jax.random.normal(k_emb, (N, FEATS), dtype=jnp.float32)
    stdv = 1.0 / math.sqrt(FEATS)                      # matches reset_param
    scorer = jax.random.uniform(k_scorer, (FEATS, 1),
                                minval=-stdv, maxval=stdv, dtype=jnp.float32)
    mask = jnp.array([0.0, 0.0, -jnp.inf, 0.0, 0.0, 0.0, -jnp.inf, 0.0],
                     dtype=jnp.float32)

    out = jax.block_until_ready(topk_forward(node_embs, mask, scorer, K))
    ref = _reference(node_embs, mask, scorer, K)
    assert out.shape == (FEATS, K), out.shape
    assert jnp.allclose(out, ref, atol=1e-5, rtol=1e-5), "mismatch vs reference (small)"

    # --- test 2: multi-tile grid with a partial edge block ---
    N2, F2, K2 = 1000, 96, 16
    k1, k2, k3 = jax.random.split(jax.random.PRNGKey(0), 3)
    node_embs2 = jax.random.normal(k1, (N2, F2), dtype=jnp.float32)
    stdv2 = 1.0 / math.sqrt(F2)
    scorer2 = jax.random.uniform(k2, (F2, 1),
                                 minval=-stdv2, maxval=stdv2, dtype=jnp.float32)
    mask2 = jnp.where(jax.random.uniform(k3, (N2,)) < 0.1,
                      -jnp.inf, 0.0).astype(jnp.float32)

    out2 = jax.block_until_ready(
        topk_forward(node_embs2, mask2, scorer2, K2, row_tile=256))
    ref2 = _reference(node_embs2, mask2, scorer2, K2)
    assert out2.shape == (F2, K2), out2.shape
    assert jnp.allclose(out2, ref2, atol=1e-4, rtol=1e-4), "mismatch vs reference (tiled)"

    print("KERNEL_OK")
</pallas_src>

<mosaic_0001>
module attributes {stable_mosaic.version = 11 : i64} {
  func.func @_score_kernel(%arg0: i32, %arg1: memref<8x32xf32, #tpu.memory_space<vmem>>, %arg2: memref<1x32xf32, #tpu.memory_space<vmem>>, %arg3: memref<1x8xf32, #tpu.memory_space<vmem>>, %arg4: memref<1x8xf32, #tpu.memory_space<vmem>>) attributes {dimension_semantics = [#tpu.dimension_semantics<parallel>], iteration_bounds = array<i64: 1>, scalar_prefetch = 0 : i64, scratch_operands = 0 : i64, tpu.core_type = #tpu.core_type<tc>, window_params = [{transform_indices = @transform_0, window_bounds = array<i64: 8, 32>}, {pipeline_mode = #tpu.pipeline_mode<synchronous>, transform_indices = @transform_1, window_bounds = array<i64: 1, 32>}, {transform_indices = @transform_2, window_bounds = array<i64: 1, 8>}, {transform_indices = @transform_3, window_bounds = array<i64: 1, 8>}]} {
    %c0 = arith.constant 0 : index
    %c0_0 = arith.constant 0 : index
    %0 = vector.load %arg1[%c0, %c0_0] : memref<8x32xf32, #tpu.memory_space<vmem>>, vector<8x32xf32>
    %c0_1 = arith.constant 0 : index
    %c0_2 = arith.constant 0 : index
    %1 = vector.load %arg2[%c0_1, %c0_2] : memref<1x32xf32, #tpu.memory_space<vmem>>, vector<1x32xf32>
    %cst = arith.constant dense<0.000000e+00> : vector<1x8xf32>
    %2 = tpu.matmul %1, %0, %cst {dimension_numbers = #tpu.dot_dimension_numbers<[1], [1], [0], [0], [0, 0, 1, 0], [], []>} : vector<1x32xf32>, vector<8x32xf32>, vector<1x8xf32> -> vector<1x8xf32>
    %c0_3 = arith.constant 0 : index
    %c0_4 = arith.constant 0 : index
    %3 = vector.load %arg3[%c0_3, %c0_4] : memref<1x8xf32, #tpu.memory_space<vmem>>, vector<1x8xf32>
    %4 = arith.addf %2, %3 : vector<1x8xf32>
    %c0_5 = arith.constant 0 : index
    %c0_6 = arith.constant 0 : index
    %5 = vector.load %arg4[%c0_5, %c0_6] : memref<1x8xf32, #tpu.memory_space<vmem>>, vector<1x8xf32>
    tpu.vector_store %arg4[%c0_5, %c0_6], %4 {strides = array<i32>} : memref<1x8xf32, #tpu.memory_space<vmem>>, vector<1x8xf32>,
    return
  }
  func.func @transform_0(%arg0: i32) -> (i32, i32) {
    %c0_i32 = arith.constant 0 : i32
    %c0_i32_0 = arith.constant 0 : i32
    return %arg0, %c0_i32 : i32, i32
  }
  func.func @transform_1(%arg0: i32) -> (i32, i32) {
    %c0_i32 = arith.constant 0 : i32
    %c0_i32_0 = arith.constant 0 : i32
    %c0_i32_1 = arith.constant 0 : i32
    return %c0_i32, %c0_i32_0 : i32, i32
  }
  func.func @transform_2(%arg0: i32) -> (i32, i32) {
    %c0_i32 = arith.constant 0 : i32
    %c0_i32_0 = arith.constant 0 : i32
    return %c0_i32, %arg0 : i32, i32
  }
  func.func @transform_3(%arg0: i32) -> (i32, i32) {
    %c0_i32 = arith.constant 0 : i32
    %c0_i32_0 = arith.constant 0 : i32
    return %c0_i32, %arg0 : i32, i32
  }
}

</mosaic_0001>

<llo_original>
// kernel: tpu_custom_call.1
$region0: #{tpu_custom_call.1}
  #allocation0 [shape = 'u32[]', space=smem, size = 0x4, offset = 0x4, fixed_abs, tag = 'smem constant byte address 0x4 - core index']
  #allocation1 [shape = 'u32[72,128]{1,0:T(1,128)}', space=vmem, size = 0x9000, scoped, tag = 'internal scratch']
  %s0 = inlined_call_operand.hbm [shape: f32[8,32], index: 0, kind: input, shape index: {}]
  %s1 = inlined_call_operand.hbm [shape: f32[1,32], index: 1, kind: input, shape index: {}]
  %s2 = inlined_call_operand.vmem [shape: f32[1,8], index: 2, kind: input, shape index: {}]
  %s3 = inlined_call_operand.hbm [shape: f32[1,8], index: 3, kind: output, shape index: {}]
  %s4 = sld [smem:[#allocation0]]
  $region30: #{tpu_custom_call.1} parent=0
    _
  %s6 = ssub.s32 1, %s4
  %s7 = scalar_select 0, %s6, %s4
  $region1: #{tpu_custom_call.1} parent=0
    #allocation2 [shape = 'u8[4096]{0}', space=vmem, size = 0x1000, scoped, tag = 'input window, operand 0, single buffered']
    #allocation3 [shape = 's32[1]{0}', space=sflag, size = 0x4, scoped, tag = 'scoped memory for tpu_custom_call.1']
    #allocation4 [shape = 's32[1]{0}', space=sflag, size = 0x4, scoped, tag = 'scoped memory for tpu_custom_call.1']
    #allocation5 [shape = 'u8[512]{0}', space=vmem, size = 0x400, scoped, tag = 'input window, operand 1, single buffered']
    #allocation6 [shape = 's32[1]{0}', space=sflag, size = 0x4, scoped, tag = 'scoped memory for tpu_custom_call.1']
    #allocation7 [shape = 'u8[512]{0}', space=vmem, size = 0x400, scoped, tag = 'output window, operand 0, single buffered']
    %8 = vsyncpa [#allocation3], 0
    %9 = vsyncpa [#allocation6], 0
    %10 = vsyncpa [#allocation4], 0
    // Predicated region
    $region2: #{tpu_custom_call.1} parent=1 // pred_check
      _
    $region3: #{tpu_custom_call.1} parent=1 // pred_check_branch
      %12 = sbr.rel (0) target = $region5
    $region4: #{tpu_custom_call.1} parent=1 // pred_region
      %14 = vsyncadd [#allocation3], 0
      %s16 = sshll.u32 %s0, 4
      %s17 = int_to_ptr.hbm [resolvable:$true] %s16
      %s18 = sshll.u32 [#allocation2], 4
      %s19 = int_to_ptr.vmem [resolvable:$true] %s18
      %21 = dma.hbm_to_vmem [thread:$0]  %s17, 128, %s19, [#allocation3]
    $region5: #{tpu_custom_call.1} parent=1 // pred_fallthru
      _
    // Predicated region
    $region6: #{tpu_custom_call.1} parent=1 // pred_check
      _
    $region7: #{tpu_custom_call.1} parent=1 // pred_check_branch
      %23 = sbr.rel (0) target = $region9
    $region8: #{tpu_custom_call.1} parent=1 // pred_region
      %25 = vsyncadd [#allocation6], 0
      %s27 = sshll.u32 %s1, 4
      %s28 = int_to_ptr.hbm [resolvable:$true] %s27
      %s29 = sshll.u32 [#allocation5], 4
      %s30 = int_to_ptr.vmem [resolvable:$true] %s29
      %32 = dma.hbm_to_vmem [thread:$0]  %s28, 16, %s30, [#allocation6]
    $region9: #{tpu_custom_call.1} parent=1 // pred_fallthru
      _
    // Predicated region
    $region10: #{tpu_custom_call.1} parent=1 // pred_check
      _
    $region11: #{tpu_custom_call.1} parent=1 // pred_check_branch
      %34 = sbr.rel (0) target = $region13
    $region12: #{tpu_custom_call.1} parent=1 // pred_region
      _
    $region13: #{tpu_custom_call.1} parent=1 // pred_fallthru
      _
    // Predicated region
    $region14: #{tpu_custom_call.1} parent=1 // pred_check
      _
    $region15: #{tpu_custom_call.1} parent=1 // pred_check_branch
      %36 = sbr.rel (0) target = $region17
    $region16: #{tpu_custom_call.1} parent=1 // pred_region
      %38 = dma.done [#allocation3], 128
    $region17: #{tpu_custom_call.1} parent=1 // pred_fallthru
      _
    // Predicated region
    $region18: #{tpu_custom_call.1} parent=1 // pred_check
      _
    $region19: #{tpu_custom_call.1} parent=1 // pred_check_branch
      %40 = sbr.rel (0) target = $region21
    $region20: #{tpu_custom_call.1} parent=1 // pred_region
      %42 = dma.done [#allocation6], 16
    $region21: #{tpu_custom_call.1} parent=1 // pred_fallthru
      _
    %v43 = vld [vmem:[#allocation2] sm:$0xff]
    %v44 = vld [vmem:[#allocation5] sm:$0x1]
    %v45 = vld [vmem:[%s2] sm:$0x1]
    %vm46 = vcmask 261120
    %v48 = vsel %vm46, %v44, 0
    %v51 = vsel %vm46, %v43, 0
    %53 = vmatpush.xpose.msra.mxu0 0.0
    %54 = vmatpush.xpose.msra.mxu0 0.0
    %55 = vmatpush.xpose.msra.mxu0 0.0
    %56 = vmatpush.xpose.msra.mxu0 0.0
    %57 = vmatpush.xpose.msra.mxu0 0.0
    %58 = vmatpush.xpose.msra.mxu0 0.0
    %59 = vmatpush.xpose.msra.mxu0 0.0
    %60 = vmatpush.xpose.msra.mxu0 0.0
    %61 = vmatpush.xpose.msra.mxu0 0.0
    %62 = vmatpush.xpose.msra.mxu0 0.0
    %63 = vmatpush.xpose.msra.mxu0 0.0
    %64 = vmatpush.xpose.msra.mxu0 0.0
    %65 = vmatpush.xpose.msra.mxu0 0.0
    %66 = vmatpush.xpose.msra.mxu0 0.0
    %67 = vmatpush.xpose.msra.mxu0 0.0
    %68 = vmatpush.xpose.msra.mxu0 %v51
    %69 = vmatmul.f32.gmra.mxu0 %v48
    %v70 = vpop.f32.mrf.mxu0
    %v71 = vadd.f32 %v45, %v70
    %72 = vdwg.mxu0
    %vm73 = vcmask 57344
    %74 = vst.msk [vmem:[#allocation7] sm:$0x1] %vm73, %v71
    // Predicated region
    $region22: #{tpu_custom_call.1} parent=1 // pred_check
      _
    $region23: #{tpu_custom_call.1} parent=1 // pred_check_branch
      %76 = sbr.rel (0) target = $region25
    $region24: #{tpu_custom_call.1} parent=1 // pred_region
      %78 = vsyncadd [#allocation4], 0
      %s80 = sshll.u32 [#allocation7], 4
      %s81 = int_to_ptr.vmem [resolvable:$true] %s80
      %s82 = sshll.u32 %s3, 4
      %s83 = int_to_ptr.hbm [resolvable:$true] %s82
      %85 = dma.vmem_to_hbm [thread:$0]  %s81, 16, %s83, [#allocation4]
    $region25: #{tpu_custom_call.1} parent=1 // pred_fallthru
      _
    // Predicated region
    $region26: #{tpu_custom_call.1} parent=1 // pred_check
      _
    $region27: #{tpu_custom_call.1} parent=1 // pred_check_branch
      %87 = sbr.rel (0) target = $region29
    $region28: #{tpu_custom_call.1} parent=1 // pred_region
      %89 = dma.done [#allocation4], 16
    $region29: #{tpu_custom_call.1} parent=1 // pred_fallthru
      _
    %90 = vsyncpa [#allocation3], 1
    %91 = vsyncpa [#allocation6], 1
    %92 = vsyncpa [#allocation4], 1

</llo_original>
